<compile_context>
chip_gen: v6e
topology: v6e:2x2x1
jax: 0.10.0
libtpu: 0.0.40
codegen_flags: <defaults>
</compile_context>

<pallas_src>
import functools
import math

import jax
import jax.numpy as jnp
from jax.experimental import pallas as pl
from jax.experimental.pallas import tpu as pltpu

EPS = 1e-5
ACT_DT = jnp.bfloat16            # activation / MXU operand dtype (f32 accumulate)


def _round_up(x, m):
    return (x + m - 1) // m * m


def _cdiv(a, b):
    return -(-a // b)


def _cpad(c):
    return _round_up(c, 128)


def _detect_vmem_cap():
    """Per-core VMEM capacity by device generation (v7x: 64 MiB per core)."""
    try:
        kind = jax.devices()[0].device_kind.lower()
    except Exception:
        kind = ""
    if "v2" in kind or "v3" in kind:
        return 16 * 1024 * 1024
    if any(t in kind for t in ("v4", "v5", "v6")):
        return 128 * 1024 * 1024
    return 64 * 1024 * 1024       # v7x and conservative default


_VMEM_CAP = _detect_vmem_cap()
_VMEM_LIMIT = min(_VMEM_CAP * 3 // 4, 100 * 1024 * 1024)   # ~96MB v5e/v6e, ~48MB v7x
_SCRATCH_BUDGET = int(_VMEM_LIMIT * 0.55)                   # band/scratch sizing target


def _pick_tn(np_):
    return 256 if np_ % 256 == 0 else 128


def _pick_tk(kp):
    cands = (1024, 512, 256, 128) if _SCRATCH_BUDGET >= 24 * 1024 * 1024 else (512, 256, 128)
    for c in cands:
        if kp % c == 0:
            return c
    raise ValueError(f"K={kp} not a multiple of 128")


def _pick_tm(m, cap=1024):
    """Avoid the per-call M-pad copy where a reasonable divisor tile exists."""
    mp8 = _round_up(m, 8)
    if mp8 <= cap:
        return mp8, mp8
    for tm in range(cap, 127, -8):
        if mp8 % tm == 0:
            return mp8, tm
    mp = _round_up(m, 256)
    return mp, 256


# ---------------------------------------------------------------------------
# Band-size choosers (generation-aware VMEM budget).
# ---------------------------------------------------------------------------
def _choose_band_sep(h, wo8, cin_p, coutp, d):
    tn = _pick_tn(coutp)

    def est(th, nbuf):
        band = nbuf * (th + 2 * d) * (wo8 + 2 * d) * cin_p * 2
        bval = (th + 2 * d) * (wo8 + 2 * d) * cin_p * 2          # value load of band
        dwsc = th * wo8 * cin_p * 2
        acc = 2 * th * wo8 * cin_p * 4                           # f32 dw accumulator temps
        wt = cin_p * tn * 2 * 2
        ot = th * wo8 * tn * 2 * 2 + th * wo8 * tn * 4
        return int(1.15 * (band + bval + dwsc + acc + wt + ot))

    nbuf = 2
    th = max(1, min(h, max(1, 768 // max(wo8, 1))))
    while th > 1 and est(th, nbuf) > _SCRATCH_BUDGET:
        th -= 1
    if est(th, nbuf) > _SCRATCH_BUDGET:
        nbuf = 1
    return th, nbuf


def _choose_band_sep2(ho, wo8, cin_p, coutp):
    tn = _pick_tn(coutp)

    def est(th, nbuf):
        band = nbuf * (th + 1) * 2 * (2 * wo8 + 1) * cin_p * 2
        bval = (th + 1) * 2 * (2 * wo8 + 1) * cin_p * 2
        dwsc = th * wo8 * cin_p * 2
        acc = 2 * th * wo8 * cin_p * 4
        wt = cin_p * tn * 2 * 2
        ot = th * wo8 * tn * 2 * 2 + th * wo8 * tn * 4
        return int(1.15 * (band + bval + dwsc + acc + wt + ot))

    nbuf = 2
    th = max(1, min(ho, max(1, 512 // max(wo8, 1))))
    while th > 1 and est(th, nbuf) > _SCRATCH_BUDGET:
        th -= 1
    if est(th, nbuf) > _SCRATCH_BUDGET:
        nbuf = 1
    return th, nbuf


def _choose_band_dense(h, wo8, cin_p, coutp, d):
    tn = _pick_tn(coutp)

    def est(th, nbuf):
        band = nbuf * (th + 2 * d) * (wo8 + 2 * d) * cin_p * 2
        lhs = 2 * th * wo8 * cin_p * 2                           # per-tap slice temps
        acc = th * wo8 * tn * 4
        wt = 3 * cin_p * tn * 2 * 2
        ot = th * wo8 * tn * 2 * 2 + th * wo8 * tn * 4
        return int(1.15 * (band + lhs + acc + wt + ot))

    # For large dilation (ASPP) keep a single big band to amortize the halo.
    nbuf = 2 if d <= 2 else 1
    th = h if d > 2 else max(1, min(h, max(1, 1024 // max(wo8, 1))))
    while th > 1 and est(th, nbuf) > _SCRATCH_BUDGET:
        th -= 1
    if nbuf == 2 and est(th, nbuf) > _SCRATCH_BUDGET:
        nbuf = 1
    return th, nbuf


# ---------------------------------------------------------------------------
# Kernel 1: tiled matmul + folded-BN affine + optional ReLU (1x1 convs, stem).
# ---------------------------------------------------------------------------
def _matmul_affine_kernel(x_ref, w_ref, s_ref, b_ref, o_ref, acc_ref, *, relu):
    k = pl.program_id(2)

    @pl.when(k == 0)
    def _():
        acc_ref[...] = jnp.zeros_like(acc_ref)

    acc_ref[...] += jnp.dot(x_ref[...], w_ref[...],
                            preferred_element_type=jnp.float32)

    @pl.when(k == pl.num_programs(2) - 1)
    def _():
        y = acc_ref[...] * s_ref[...] + b_ref[...]
        if relu:
            y = jnp.maximum(y, 0.0)
        o_ref[...] = y.astype(o_ref.dtype)


@functools.lru_cache(maxsize=None)
def _matmul_affine_call(mp, kp, np_, tm, tn, tk, relu):
    return pl.pallas_call(
        functools.partial(_matmul_affine_kernel, relu=relu),
        out_shape=jax.ShapeDtypeStruct((mp, np_), ACT_DT),
        grid_spec=pltpu.PrefetchScalarGridSpec(
            num_scalar_prefetch=0,
            grid=(mp // tm, np_ // tn, kp // tk),
            in_specs=[pl.BlockSpec((tm, tk), lambda i, j, k: (i, k)),
                      pl.BlockSpec((tk, tn), lambda i, j, k: (k, j)),
                      pl.BlockSpec((1, tn), lambda i, j, k: (0, j)),
                      pl.BlockSpec((1, tn), lambda i, j, k: (0, j))],
            out_specs=pl.BlockSpec((tm, tn), lambda i, j, k: (i, j)),
            scratch_shapes=[pltpu.VMEM((tm, tn), jnp.float32)]),
        compiler_params=pltpu.CompilerParams(
            dimension_semantics=("parallel", "parallel", "arbitrary"),
            vmem_limit_bytes=_VMEM_LIMIT))


def matmul_affine(x, w, scale, shift, relu=False):
    """y = relu?((x @ w) * scale + shift).  w:(Kp,Np) pre-padded bf16."""
    m, k = x.shape
    kp, np_ = w.shape
    x = x.astype(ACT_DT)
    if kp != k:
        x = jnp.pad(x, ((0, 0), (0, kp - k)))
    mp, tm = _pick_tm(m)
    if mp != m:
        x = jnp.pad(x, ((0, mp - m), (0, 0)))
    call = _matmul_affine_call(mp, kp, np_, tm, _pick_tn(np_), _pick_tk(kp),
                               bool(relu))
    out = call(x, w, scale, shift)
    return out[:m] if mp != m else out


def pointwise(x, w, scale, shift, relu=False):
    n, h, wd, c = x.shape
    y = matmul_affine(x.reshape(n * h * wd, c), w, scale, shift, relu)
    return y.reshape(n, h, wd, w.shape[1])


# ---------------------------------------------------------------------------
# Kernel 2: fused depthwise 3x3 (+optional preceding ReLU, once per band)
#           -> 1x1 pointwise (+folded BN affine, optional trailing ReLU).
#           Banded over H; input band double-buffered via manual DMA.
# ---------------------------------------------------------------------------
def _sep_fused_kernel(x_hbm, dww_ref, pww_ref, s_ref, b_ref, o_ref,
                      band_ref, dw_ref, sem,
                      *, th, wo8, rows_in, hin_rows, dilation, nbuf,
                      relu_in, relu_out):
    b = pl.program_id(0)
    hb = pl.program_id(1)
    j = pl.program_id(2)
    nb = pl.num_programs(1)
    c = dw_ref.shape[-1]
    slot = (hb & 1) if nbuf == 2 else 0

    @pl.when(j == 0)
    def _():
        row0 = b * hin_rows + hb * th
        dst = band_ref.at[pl.ds(slot * rows_in, rows_in)]
        if nbuf == 2:
            @pl.when(hb == 0)
            def _():
                pltpu.make_async_copy(x_hbm.at[pl.ds(row0, rows_in)], dst,
                                      sem.at[slot]).start()
            pltpu.make_async_copy(x_hbm.at[pl.ds(row0, rows_in)], dst,
                                  sem.at[slot]).wait()

            @pl.when(hb + 1 < nb)
            def _():                                  # prefetch next band
                pltpu.make_async_copy(
                    x_hbm.at[pl.ds(row0 + th, rows_in)],
                    band_ref.at[pl.ds((1 - slot) * rows_in, rows_in)],
                    sem.at[1 - slot]).start()
        else:
            cp = pltpu.make_async_copy(x_hbm.at[pl.ds(row0, rows_in)], dst,
                                       sem.at[0])
            cp.start()
            cp.wait()

        xb = band_ref[pl.ds(slot * rows_in, rows_in)]   # (rows_in, wp8, c)
        if relu_in:
            xb = jnp.maximum(xb, 0.0)                    # ReLU once per band
        acc = jnp.zeros((th, wo8, c), jnp.float32)
        for ky in range(3):                              # 9 whole-band taps
            for kx in range(3):
                tap = xb[ky * dilation:ky * dilation + th,
                         kx * dilation:kx * dilation + wo8, :]
                wk = dww_ref[3 * ky + kx:3 * ky + kx + 1, :].reshape(1, 1, c)
                acc = acc + tap * wk
        dw_ref[...] = acc.reshape(th * wo8, c).astype(dw_ref.dtype)

    y = jnp.dot(dw_ref[...], pww_ref[...], preferred_element_type=jnp.float32)
    y = y * s_ref[...] + b_ref[...]
    if relu_out:
        y = jnp.maximum(y, 0.0)
    o_ref[0] = y.astype(o_ref.dtype)


@functools.lru_cache(maxsize=None)
def _sep_fused_call(n, h, w, c, coutp, d, th, nbuf, relu_in, relu_out):
    wo8 = _round_up(w, 8)
    nb = _cdiv(h, th)
    hpad = nb * th
    rows_total = hpad + 2 * d
    wp8 = wo8 + 2 * d
    rows_in = th + 2 * d
    tn = _pick_tn(coutp)
    kern = functools.partial(_sep_fused_kernel, th=th, wo8=wo8, rows_in=rows_in,
                             hin_rows=rows_total, dilation=d, nbuf=nbuf,
                             relu_in=relu_in, relu_out=relu_out)
    return pl.pallas_call(
        kern,
        out_shape=jax.ShapeDtypeStruct((n, hpad * wo8, coutp), ACT_DT),
        grid_spec=pltpu.PrefetchScalarGridSpec(
            num_scalar_prefetch=0,
            grid=(n, nb, coutp // tn),
            in_specs=[pl.BlockSpec(memory_space=pl.ANY),
                      pl.BlockSpec((9, c), lambda b, hb, j: (0, 0)),
                      pl.BlockSpec((c, tn), lambda b, hb, j: (0, j)),
                      pl.BlockSpec((1, tn), lambda b, hb, j: (0, j)),
                      pl.BlockSpec((1, tn), lambda b, hb, j: (0, j))],
            out_specs=pl.BlockSpec((1, th * wo8, tn), lambda b, hb, j: (b, hb, j)),
            scratch_shapes=[pltpu.VMEM((nbuf * rows_in, wp8, c), ACT_DT),
                            pltpu.VMEM((th * wo8, c), jnp.bfloat16),
                            pltpu.SemaphoreType.DMA((2,))]),
        # hb is "arbitrary" (sequential) so the cross-band prefetch chain is
        # megacore-safe; batch carries the "parallel" split.
        compiler_params=pltpu.CompilerParams(
            dimension_semantics=("parallel", "arbitrary", "arbitrary"),
            vmem_limit_bytes=_VMEM_LIMIT))


def sep_conv_fused(x, dw, pw, scale, shift, dilation, relu_in, relu_out):
    n, h, w, c = x.shape
    coutp = pw.shape[1]
    d = dilation
    wo8 = _round_up(w, 8)
    th, nbuf = _choose_band_sep(h, wo8, c, coutp, d)
    nb = _cdiv(h, th)
    hpad = nb * th
    rows_total = hpad + 2 * d
    wp8 = wo8 + 2 * d
    xq = jnp.pad(x.astype(ACT_DT),
                 ((0, 0), (d, rows_total - h - d), (d, wp8 - w - d), (0, 0)))
    xq = xq.reshape(n * rows_total, wp8, c)
    call = _sep_fused_call(n, h, w, c, coutp, d, th, nbuf,
                           bool(relu_in), bool(relu_out))
    y = call(xq, dw, pw, scale, shift).reshape(n, hpad, wo8, coutp)
    if hpad != h or wo8 != w:
        y = y[:, :h, :w, :]
    return y


# ---------------------------------------------------------------------------
# Kernel 3: fused stride-2 depthwise 3x3 -> 1x1 pointwise (the three block
#           downsamples).  Stride applied in-kernel: columns pre-split into
#           even/odd planes in the wrapper, rows handled via row-pair layout.
# ---------------------------------------------------------------------------
def _sep2_kernel(xe_hbm, xo_hbm, dww_ref, pww_ref, s_ref, b_ref, o_ref,
                 bande_ref, bando_ref, dw_ref, sem,
                 *, th, wo8, hin_pairs, nbuf):
    b = pl.program_id(0)
    hb = pl.program_id(1)
    j = pl.program_id(2)
    nb = pl.num_programs(1)
    c = dw_ref.shape[-1]
    pairs_in = th + 1
    slot = (hb & 1) if nbuf == 2 else 0

    @pl.when(j == 0)
    def _():
        row0 = b * hin_pairs + hb * th

        def start(r0, sl):
            pltpu.make_async_copy(
                xe_hbm.at[pl.ds(r0, pairs_in)],
                bande_ref.at[pl.ds(sl * pairs_in, pairs_in)],
                sem.at[2 * sl]).start()
            pltpu.make_async_copy(
                xo_hbm.at[pl.ds(r0, pairs_in)],
                bando_ref.at[pl.ds(sl * pairs_in, pairs_in)],
                sem.at[2 * sl + 1]).start()

        def wait(r0, sl):
            pltpu.make_async_copy(
                xe_hbm.at[pl.ds(r0, pairs_in)],
                bande_ref.at[pl.ds(sl * pairs_in, pairs_in)],
                sem.at[2 * sl]).wait()
            pltpu.make_async_copy(
                xo_hbm.at[pl.ds(r0, pairs_in)],
                bando_ref.at[pl.ds(sl * pairs_in, pairs_in)],
                sem.at[2 * sl + 1]).wait()

        if nbuf == 2:
            @pl.when(hb == 0)
            def _():
                start(row0, slot)
            wait(row0, slot)

            @pl.when(hb + 1 < nb)
            def _():
                start(row0 + th, 1 - slot)
        else:
            start(row0, 0)
            wait(row0, 0)

        xe = bande_ref[pl.ds(slot * pairs_in, pairs_in)]   # (pairs_in, 2, wo8+1, c)
        xo = bando_ref[pl.ds(slot * pairs_in, pairs_in)]   # (pairs_in, 2, wo8, c)
        acc = jnp.zeros((th, wo8, c), jnp.float32)
        for ky in range(3):
            po = 0 if ky < 2 else 1                 # row-pair offset
            pe = ky & 1                             # row parity within pair
            re = xe[po:po + th, pe]                 # even input columns
            ro = xo[po:po + th, pe]                 # odd  input columns
            acc = acc + re[:, 0:wo8, :] * dww_ref[3 * ky + 0:3 * ky + 1, :].reshape(1, 1, c)
            acc = acc + ro[:, 0:wo8, :] * dww_ref[3 * ky + 1:3 * ky + 2, :].reshape(1, 1, c)
            acc = acc + re[:, 1:1 + wo8, :] * dww_ref[3 * ky + 2:3 * ky + 3, :].reshape(1, 1, c)
        dw_ref[...] = acc.reshape(th * wo8, c).astype(dw_ref.dtype)

    y = jnp.dot(dw_ref[...], pww_ref[...], preferred_element_type=jnp.float32)
    y = y * s_ref[...] + b_ref[...]
    o_ref[0] = y.astype(o_ref.dtype)


@functools.lru_cache(maxsize=None)
def _sep2_call(n, ho, wo, c, coutp, th, nbuf):
    wo8 = _round_up(wo, 8)
    nb = _cdiv(ho, th)
    hop = nb * th
    we = wo8 + 1
    tn = _pick_tn(coutp)
    kern = functools.partial(_sep2_kernel, th=th, wo8=wo8,
                             hin_pairs=hop + 1, nbuf=nbuf)
    return pl.pallas_call(
        kern,
        out_shape=jax.ShapeDtypeStruct((n, hop * wo8, coutp), ACT_DT),
        grid_spec=pltpu.PrefetchScalarGridSpec(
            num_scalar_prefetch=0,
            grid=(n, nb, coutp // tn),
            in_specs=[pl.BlockSpec(memory_space=pl.ANY),
                      pl.BlockSpec(memory_space=pl.ANY),
                      pl.BlockSpec((9, c), lambda b, hb, j: (0, 0)),
                      pl.BlockSpec((c, tn), lambda b, hb, j: (0, j)),
                      pl.BlockSpec((1, tn), lambda b, hb, j: (0, j)),
                      pl.BlockSpec((1, tn), lambda b, hb, j: (0, j))],
            out_specs=pl.BlockSpec((1, th * wo8, tn), lambda b, hb, j: (b, hb, j)),
            scratch_shapes=[pltpu.VMEM((nbuf * (th + 1), 2, we, c), ACT_DT),
                            pltpu.VMEM((nbuf * (th + 1), 2, wo8, c), ACT_DT),
                            pltpu.VMEM((th * wo8, c), jnp.bfloat16),
                            pltpu.SemaphoreType.DMA((4,))]),
        compiler_params=pltpu.CompilerParams(
            dimension_semantics=("parallel", "arbitrary", "arbitrary"),
            vmem_limit_bytes=_VMEM_LIMIT))


def sep_conv_stride2_fused(x, dw, pw, scale, shift):
    n, h, w, c = x.shape
    coutp = pw.shape[1]
    ho = (h - 1) // 2 + 1
    wo = (w - 1) // 2 + 1
    wo8 = _round_up(wo, 8)
    th, nbuf = _choose_band_sep2(ho, wo8, c, coutp)
    nb = _cdiv(ho, th)
    hop = nb * th
    rows_need = 2 * (hop + 1)
    cols_need = 2 * wo8 + 1
    xp = jnp.pad(x.astype(ACT_DT),
                 ((0, 0), (1, rows_need - h - 1), (1, cols_need - w - 1), (0, 0)))
    xe = xp[:, :, 0::2, :].reshape(n * (hop + 1), 2, wo8 + 1, c)
    xo = xp[:, :, 1::2, :].reshape(n * (hop + 1), 2, wo8, c)
    y = _sep2_call(n, ho, wo, c, coutp, th, nbuf)(xe, xo, dw, pw, scale, shift)
    y = y.reshape(n, hop, wo8, coutp)
    if hop != ho or wo8 != wo:
        y = y[:, :ho, :wo, :]
    return y


# ---------------------------------------------------------------------------
# Kernel 4: dense 3x3 conv (stride 1, dilation 1..18) + BN + optional ReLU.
#           No im2col: 3 per-tap MXU matmuls per ky grid step accumulate into
#           a f32 scratch.  Handles conv2, decoder 3x3s and the ASPP branches.
# ---------------------------------------------------------------------------
def _conv3x3_kernel(x_hbm, w_ref, s_ref, b_ref, o_ref, band_ref, acc_ref, sem,
                    *, th, wo8, rows_in, hin_rows, dilation, nbuf, relu_out):
    b = pl.program_id(0)
    hb = pl.program_id(1)
    j = pl.program_id(2)
    ky = pl.program_id(3)
    nb = pl.num_programs(1)
    cin = band_ref.shape[-1]
    slot = (hb & 1) if nbuf == 2 else 0

    @pl.when(jnp.logical_and(j == 0, ky == 0))
    def _():
        row0 = b * hin_rows + hb * th
        dst = band_ref.at[pl.ds(slot * rows_in, rows_in)]
        if nbuf == 2:
            @pl.when(hb == 0)
            def _():
                pltpu.make_async_copy(x_hbm.at[pl.ds(row0, rows_in)], dst,
                                      sem.at[slot]).start()
            pltpu.make_async_copy(x_hbm.at[pl.ds(row0, rows_in)], dst,
                                  sem.at[slot]).wait()

            @pl.when(hb + 1 < nb)
            def _():
                pltpu.make_async_copy(
                    x_hbm.at[pl.ds(row0 + th, rows_in)],
                    band_ref.at[pl.ds((1 - slot) * rows_in, rows_in)],
                    sem.at[1 - slot]).start()
        else:
            cp = pltpu.make_async_copy(x_hbm.at[pl.ds(row0, rows_in)], dst,
                                       sem.at[0])
            cp.start()
            cp.wait()

    @pl.when(ky == 0)
    def _():
        acc_ref[...] = jnp.zeros_like(acc_ref)

    base = slot * rows_in + ky * dilation
    for kx in range(3):
        lhs = band_ref[pl.ds(base, th),
                       kx * dilation:kx * dilation + wo8, :]
        acc_ref[...] += jnp.dot(lhs.reshape(th * wo8, cin), w_ref[kx],
                                preferred_element_type=jnp.float32)

    @pl.when(ky == pl.num_programs(3) - 1)
    def _():
        y = acc_ref[...] * s_ref[...] + b_ref[...]
        if relu_out:
            y = jnp.maximum(y, 0.0)
        o_ref[0] = y.astype(o_ref.dtype)


@functools.lru_cache(maxsize=None)
def _conv3x3_call(n, h, w, c, coutp, d, th, nbuf, relu_out):
    wo8 = _round_up(w, 8)
    nb = _cdiv(h, th)
    hpad = nb * th
    rows_total = hpad + 2 * d
    wp8 = wo8 + 2 * d
    rows_in = th + 2 * d
    tn = _pick_tn(coutp)
    kern = functools.partial(_conv3x3_kernel, th=th, wo8=wo8, rows_in=rows_in,
                             hin_rows=rows_total, dilation=d, nbuf=nbuf,
                             relu_out=relu_out)
    return pl.pallas_call(
        kern,
        out_shape=jax.ShapeDtypeStruct((n, hpad * wo8, coutp), ACT_DT),
        grid_spec=pltpu.PrefetchScalarGridSpec(
            num_scalar_prefetch=0,
            grid=(n, nb, coutp // tn, 3),
            in_specs=[pl.BlockSpec(memory_space=pl.ANY),
                      pl.BlockSpec((3, c, tn), lambda b, hb, j, ky: (ky, 0, j)),
                      pl.BlockSpec((1, tn), lambda b, hb, j, ky: (0, j)),
                      pl.BlockSpec((1, tn), lambda b, hb, j, ky: (0, j))],
            out_specs=pl.BlockSpec((1, th * wo8, tn),
                                   lambda b, hb, j, ky: (b, hb, j)),
            scratch_shapes=[pltpu.VMEM((nbuf * rows_in, wp8, c), ACT_DT),
                            pltpu.VMEM((th * wo8, tn), jnp.float32),
                            pltpu.SemaphoreType.DMA((2,))]),
        compiler_params=pltpu.CompilerParams(
            dimension_semantics=("parallel", "arbitrary", "arbitrary",
                                 "arbitrary"),
            vmem_limit_bytes=_VMEM_LIMIT))


def conv3x3_same(x, w3, scale, shift, dilation=1, relu_out=False):
    n, h, w, c = x.shape
    coutp = w3.shape[-1]
    d = dilation
    wo8 = _round_up(w, 8)
    th, nbuf = _choose_band_dense(h, wo8, c, coutp, d)
    nb = _cdiv(h, th)
    hpad = nb * th
    rows_total = hpad + 2 * d
    wp8 = wo8 + 2 * d
    xq = jnp.pad(x.astype(ACT_DT),
                 ((0, 0), (d, rows_total - h - d), (d, wp8 - w - d), (0, 0)))
    xq = xq.reshape(n * rows_total, wp8, c)
    call = _conv3x3_call(n, h, w, c, coutp, d, th, nbuf, bool(relu_out))
    y = call(xq, w3, scale, shift).reshape(n, hpad, wo8, coutp)
    if hpad != h or wo8 != w:
        y = y[:, :h, :w, :]
    return y


# ------------------------------- XLA helpers --------------------------------
def im2col_stem(x, kp):
    """3x3 stride-2 pad-1 im2col for the stem conv only, K-padded in place."""
    n, h, w, c = x.shape
    xp = jnp.pad(x.astype(ACT_DT), ((0, 0), (1, 1), (1, 1), (0, 0)))
    ho = (h - 1) // 2 + 1
    wo = (w - 1) // 2 + 1
    cols = []
    for ky in range(3):
        for kx in range(3):
            cols.append(xp[:, ky:ky + 2 * (ho - 1) + 1:2,
                           kx:kx + 2 * (wo - 1) + 1:2, :])
    cols.append(jnp.zeros((n, ho, wo, kp - 9 * c), ACT_DT))
    return jnp.concatenate(cols, axis=-1).reshape(n * ho * wo, kp), ho, wo


def resize_bilinear(x, oh, ow):
    """Bilinear resize, align_corners=True (plain JAX).  TODO(synk): not Pallas."""
    n, h, w, c = x.shape
    x = x.astype(jnp.float32)
    if h == oh and w == ow:
        return x

    def grid(o, i):
        if o == 1 or i == 1:
            z = jnp.zeros((o,), jnp.float32)
            zi = jnp.zeros((o,), jnp.int32)
            return z, zi, zi
        pos = jnp.arange(o, dtype=jnp.float32) * ((i - 1) / (o - 1))
        lo = jnp.clip(jnp.floor(pos), 0, i - 2).astype(jnp.int32)
        return pos - lo.astype(jnp.float32), lo, lo + 1

    fy, y0, y1 = grid(oh, h)
    fx, x0, x1 = grid(ow, w)
    top = jnp.take(x, y0, axis=1)
    bot = jnp.take(x, y1, axis=1)
    v = top + (bot - top) * fy[None, :, None, None]
    left = jnp.take(v, x0, axis=2)
    right = jnp.take(v, x1, axis=2)
    return left + (right - left) * fx[None, None, :, None]


# ------------------------------- parameters ---------------------------------
class KeyGen:
    def __init__(self, key):
        self._key = key
        self._i = 0

    def __call__(self):
        self._i += 1
        return jax.random.fold_in(self._key, self._i)


def kaiming(key, shape, fan_in):
    return jax.random.normal(key, shape, jnp.float32) * math.sqrt(2.0 / fan_in)


def make_bn_affine(c):
    cp = _cpad(c)
    scale = jnp.zeros((1, cp), jnp.float32).at[0, :c].set(
        1.0 / math.sqrt(1.0 + EPS))
    shift = jnp.zeros((1, cp), jnp.float32)
    return scale, shift


def make_id_affine(c):
    cp = _cpad(c)
    scale = jnp.zeros((1, cp), jnp.float32).at[0, :c].set(1.0)
    shift = jnp.zeros((1, cp), jnp.float32)
    return scale, shift


def make_pw(kg, cin, cout):
    w = kaiming(kg(), (cout, cin), cin)                          # torch (O,I,1,1)
    wp = jnp.zeros((_cpad(cin), _cpad(cout)), jnp.float32)
    wp = wp.at[:cin, :cout].set(w.T)
    return wp.astype(jnp.bfloat16)


def make_conv3x3_w(kg, cin, cout):
    """Dense 3x3 weights in tap-major (9, cin_pad, cout_pad) layout."""
    w = kaiming(kg(), (cout, cin, 3, 3), cin * 9)                # torch OIHW
    w = jnp.transpose(w, (2, 3, 1, 0)).reshape(9, cin, cout)
    wp = jnp.zeros((9, _cpad(cin), _cpad(cout)), jnp.float32)
    wp = wp.at[:, :cin, :cout].set(w)
    return wp.astype(jnp.bfloat16)


def make_im2col_w(kg, cin, cout):
    """Stem conv weights for the XLA-im2col + matmul path (tap-major rows)."""
    w = kaiming(kg(), (cout, cin, 3, 3), cin * 9)
    w2 = jnp.transpose(w, (2, 3, 1, 0)).reshape(9 * cin, cout)
    wp = jnp.zeros((_round_up(9 * cin, 128), _cpad(cout)), jnp.float32)
    wp = wp.at[:9 * cin, :cout].set(w2)
    return wp.astype(jnp.bfloat16)


def make_sep(kg, cin, cout):
    dw = kaiming(kg(), (cin, 3, 3), 9)                            # torch (I,1,3,3)
    dwp = jnp.zeros((9, _cpad(cin)), jnp.float32)
    dwp = dwp.at[:, :cin].set(jnp.transpose(dw, (1, 2, 0)).reshape(9, cin))
    return dwp, make_pw(kg, cin, cout)


def make_block(kg, inplanes, planes, reps, stride=1, dilation=1,
               start_with_relu=True, grow_first=True):
    seps = []

    def add(cin, cout, dil, relu_in, has_bn, st=1):
        dw, pw = make_sep(kg, cin, cout)
        scale, shift = make_bn_affine(cout) if has_bn else make_id_affine(cout)
        seps.append(dict(dw=dw, pw=pw, scale=scale, shift=shift,
                         stride=st, dilation=dil, relu_in=relu_in))

    filters = inplanes
    if grow_first:
        add(inplanes, planes, dilation, True, True)
        filters = planes
    for _ in range(reps - 1):
        add(filters, filters, dilation, True, True)
    if not grow_first:
        add(inplanes, planes, dilation, True, True)
    if not start_with_relu:
        seps[0]['relu_in'] = False
    if stride != 1:
        add(planes, planes, 1, False, False, st=stride)
    if planes != inplanes or stride != 1:
        skip = dict(w=make_pw(kg, inplanes, planes),
                    bn=make_bn_affine(planes), stride=stride)
    else:
        skip = None
    return dict(seps=seps, skip=skip)


def make_xception_params(key, inplanes=3):
    kg = KeyGen(key)
    p = {}
    p['conv1_w'] = make_im2col_w(kg, inplanes, 32)
    p['bn1'] = make_bn_affine(32)
    p['conv2_w'] = make_conv3x3_w(kg, 32, 64)
    p['bn2'] = make_bn_affine(64)
    p['block1'] = make_block(kg, 64, 128, 2, stride=2,
                             start_with_relu=False, grow_first=True)
    p['block2'] = make_block(kg, 128, 256, 2, stride=2)
    p['block3'] = make_block(kg, 256, 728, 2, stride=2)
    p['middle'] = [make_block(kg, 728, 728, 3) for _ in range(16)]
    p['block20'] = make_block(kg, 728, 1024, 2, stride=1, dilation=2,
                              start_with_relu=True, grow_first=False)
    p['conv3'] = make_sep(kg, 1024, 1536)
    p['bn3'] = make_bn_affine(1536)
    p['conv4'] = make_sep(kg, 1536, 1536)
    p['bn4'] = make_bn_affine(1536)
    p['conv5'] = make_sep(kg, 1536, 2048)
    p['bn5'] = make_bn_affine(2048)
    return p


def make_decoder_params(key, n_classes=21):
    kg = KeyGen(key)
    d = {}
    d['aspp1_w'] = make_pw(kg, 2048, 256)
    d['aspp1_bn'] = make_bn_affine(256)
    for nm in ('aspp2', 'aspp3', 'aspp4'):
        d[nm + '_w'] = make_conv3x3_w(kg, 2048, 256)
        d[nm + '_bn'] = make_bn_affine(256)
    d['gap_w'] = make_pw(kg, 2048, 256)
    d['gap_bn'] = make_bn_affine(256)
    d['proj_w'] = make_pw(kg, 1280, 256)
    d['proj_bn'] = make_bn_affine(256)
    d['low_w'] = make_pw(kg, 128, 48)
    d['low_bn'] = make_bn_affine(48)
    d['dec1_w'] = make_conv3x3_w(kg, 304, 256)     # concat = 256 + 48 real
    d['dec1_bn'] = make_bn_affine(256)
    d['dec2_w'] = make_conv3x3_w(kg, 256, 256)
    d['dec2_bn'] = make_bn_affine(256)
    d['cls_w'] = make_pw(kg, 256, n_classes)
    d['cls_scale'] = jnp.zeros((1, _cpad(n_classes)),
                               jnp.float32).at[0, :n_classes].set(1.0)
    d['cls_shift'] = jnp.zeros((1, _cpad(n_classes)), jnp.float32)  # bias = 0
    return d


def make_deeplab_params(key, n_input_channels=3, n_classes=21):
    return dict(xception=make_xception_params(jax.random.fold_in(key, 1),
                                              n_input_channels),
                decoder=make_decoder_params(jax.random.fold_in(key, 2),
                                            n_classes),
                n_classes=n_classes)


# -------------------------------- forward -----------------------------------
def sep_forward(x, sp):
    if sp['stride'] == 1:
        return sep_conv_fused(x, sp['dw'], sp['pw'], sp['scale'], sp['shift'],
                              sp['dilation'], sp['relu_in'], relu_out=False)
    return sep_conv_stride2_fused(x, sp['dw'], sp['pw'], sp['scale'],
                                  sp['shift'])


def block_forward(x, bp):
    out = x
    for sp in bp['seps']:
        out = sep_forward(out, sp)
    if bp['skip'] is not None:
        s = bp['skip']['stride']
        sk = x[:, ::s, ::s, :] if s > 1 else x
        sk = pointwise(sk, bp['skip']['w'], *bp['skip']['bn'], relu=False)
    else:
        sk = x
    return out + sk


def xception_forward(p, x):
    n = x.shape[0]
    patches, ho, wo = im2col_stem(x, p['conv1_w'].shape[0])
    x = matmul_affine(patches, p['conv1_w'], *p['bn1'], relu=True)
    x = x.reshape(n, ho, wo, -1)
    x = conv3x3_same(x, p['conv2_w'], *p['bn2'], dilation=1, relu_out=True)
    x = block_forward(x, p['block1'])
    low = x
    x = block_forward(x, p['block2'])
    x = block_forward(x, p['block3'])
    for bp in p['middle']:
        x = block_forward(x, bp)
    x = block_forward(x, p['block20'])
    for i in (3, 4, 5):
        dw, pw = p['conv%d' % i]
        scale, shift = p['bn%d' % i]
        x = sep_conv_fused(x, dw, pw, scale, shift,
                           dilation=2, relu_in=False, relu_out=True)
    return x, low


def deeplab_forward(params, x_nchw):
    px, pd = params['xception'], params['decoder']
    x = jnp.transpose(x_nchw, (0, 2, 3, 1)).astype(ACT_DT)       # NCHW -> NHWC
    feat, low = xception_forward(px, x)
    n, hf, wf, _ = feat.shape

    branches = [pointwise(feat, pd['aspp1_w'], *pd['aspp1_bn'], relu=True)]
    for name, rate in (('aspp2', 6), ('aspp3', 12), ('aspp4', 18)):
        branches.append(conv3x3_same(feat, pd[name + '_w'], *pd[name + '_bn'],
                                     dilation=rate, relu_out=True))
    gap = jnp.mean(feat.astype(jnp.float32), axis=(1, 2), keepdims=True)
    gap = pointwise(gap, pd['gap_w'], *pd['gap_bn'], relu=True)
    branches.append(resize_bilinear(gap, hf, wf).astype(ACT_DT))

    x = jnp.concatenate(branches, axis=-1)                       # (N,Hf,Wf,1280)
    x = pointwise(x, pd['proj_w'], *pd['proj_bn'], relu=True)
    x = resize_bilinear(x, 4 * hf, 4 * wf).astype(ACT_DT)

    low = pointwise(low, pd['low_w'], *pd['low_bn'], relu=True)
    x = jnp.concatenate([x, low], axis=-1)                       # 304 real / 384
    x = conv3x3_same(x, pd['dec1_w'], *pd['dec1_bn'], dilation=1, relu_out=True)
    x = conv3x3_same(x, pd['dec2_w'], *pd['dec2_bn'], dilation=1, relu_out=True)
    x = pointwise(x, pd['cls_w'], pd['cls_scale'], pd['cls_shift'], relu=False)
    x = x[..., :params['n_classes']]
    _, hd, wd, _ = x.shape
    x = resize_bilinear(x, 4 * hd, 4 * wd)
    return jnp.transpose(x, (0, 3, 1, 2))                        # NHWC -> NCHW


if __name__ == "__main__":
    root = jax.random.PRNGKey(0)
    params = make_deeplab_params(root, n_input_channels=3, n_classes=21)
    x = jax.random.normal(jax.random.fold_in(root, 99), (2, 3, 16, 16),
                          jnp.float32)
    out = deeplab_forward(params, x)
    jax.block_until_ready(out)
    assert out.shape == (2, 21, 16, 16), out.shape
    print("KERNEL_OK")
</pallas_src>

<mosaic_0001>
module attributes {stable_mosaic.version = 11 : i64} {
  func.func @_matmul_affine_kernel(%arg0: i32, %arg1: i32, %arg2: i32, %arg3: memref<128x128xbf16, #tpu.memory_space<vmem>>, %arg4: memref<128x128xbf16, #tpu.memory_space<vmem>>, %arg5: memref<1x128xf32, #tpu.memory_space<vmem>>, %arg6: memref<1x128xf32, #tpu.memory_space<vmem>>, %arg7: memref<128x128xbf16, #tpu.memory_space<vmem>>, %arg8: memref<128x128xf32, #tpu.memory_space<vmem>>) attributes {dimension_semantics = [#tpu.dimension_semantics<parallel>, #tpu.dimension_semantics<parallel>, #tpu.dimension_semantics<arbitrary>], iteration_bounds = array<i64: 1, 1, 1>, scalar_prefetch = 0 : i64, scratch_operands = 1 : i64, tpu.core_type = #tpu.core_type<tc>, window_params = [{transform_indices = @transform_0, window_bounds = array<i64: 128, 128>}, {transform_indices = @transform_1, window_bounds = array<i64: 128, 128>}, {transform_indices = @transform_2, window_bounds = array<i64: 1, 128>}, {transform_indices = @transform_3, window_bounds = array<i64: 1, 128>}, {transform_indices = @transform_4, window_bounds = array<i64: 128, 128>}]} {
    %c0_i32 = arith.constant 0 : i32
    %0 = arith.cmpi eq, %arg2, %c0_i32 : i32
    %1 = arith.extui %0 : i1 to i32
    %c0_i32_0 = arith.constant 0 : i32
    %2 = arith.cmpi ne, %1, %c0_i32_0 : i32
    scf.if %2 {
      %cst_10 = arith.constant 0.000000e+00 : f32
      %12 = vector.broadcast %cst_10 : f32 to vector<128x128xf32>
      %c0_11 = arith.constant 0 : index
      %c0_12 = arith.constant 0 : index
      %13 = vector.load %arg8[%c0_11, %c0_12] : memref<128x128xf32, #tpu.memory_space<vmem>>, vector<128x128xf32>
      tpu.vector_store %arg8[%c0_11, %c0_12], %12 {strides = array<i32>} : memref<128x128xf32, #tpu.memory_space<vmem>>, vector<128x128xf32>,
    } else {
    }
    %c0 = arith.constant 0 : index
    %c0_1 = arith.constant 0 : index
    %3 = vector.load %arg8[%c0, %c0_1] : memref<128x128xf32, #tpu.memory_space<vmem>>, vector<128x128xf32>
    %c0_2 = arith.constant 0 : index
    %c0_3 = arith.constant 0 : index
    %4 = vector.load %arg3[%c0_2, %c0_3] : memref<128x128xbf16, #tpu.memory_space<vmem>>, vector<128x128xbf16>
    %c0_4 = arith.constant 0 : index
    %c0_5 = arith.constant 0 : index
    %5 = vector.load %arg4[%c0_4, %c0_5] : memref<128x128xbf16, #tpu.memory_space<vmem>>, vector<128x128xbf16>
    %cst = arith.constant dense<0.000000e+00> : vector<128x128xf32>
    %6 = tpu.matmul %4, %5, %cst {dimension_numbers = #tpu.dot_dimension_numbers<[1], [0], [0], [1], [0, 0, 1, 1], [], []>} : vector<128x128xbf16>, vector<128x128xbf16>, vector<128x128xf32> -> vector<128x128xf32>
    %7 = arith.addf %3, %6 : vector<128x128xf32>
    %c0_6 = arith.constant 0 : index
    %c0_7 = arith.constant 0 : index
    %8 = vector.load %arg8[%c0_6, %c0_7] : memref<128x128xf32, #tpu.memory_space<vmem>>, vector<128x128xf32>
    tpu.vector_store %arg8[%c0_6, %c0_7], %7 {strides = array<i32>} : memref<128x128xf32, #tpu.memory_space<vmem>>, vector<128x128xf32>,
    %c0_i32_8 = arith.constant 0 : i32
    %9 = arith.cmpi eq, %arg2, %c0_i32_8 : i32
    %10 = arith.extui %9 : i1 to i32
    %c0_i32_9 = arith.constant 0 : i32
    %11 = arith.cmpi ne, %10, %c0_i32_9 : i32
    scf.if %11 {
      %c0_10 = arith.constant 0 : index
      %c0_11 = arith.constant 0 : index
      %12 = vector.load %arg8[%c0_10, %c0_11] : memref<128x128xf32, #tpu.memory_space<vmem>>, vector<128x128xf32>
      %c0_12 = arith.constant 0 : index
      %c0_13 = arith.constant 0 : index
      %13 = vector.load %arg5[%c0_12, %c0_13] : memref<1x128xf32, #tpu.memory_space<vmem>>, vector<1x128xf32>
      %14 = vector.broadcast %13 : vector<1x128xf32> to vector<128x128xf32>
      %15 = arith.mulf %12, %14 : vector<128x128xf32>
      %c0_14 = arith.constant 0 : index
      %c0_15 = arith.constant 0 : index
      %16 = vector.load %arg6[%c0_14, %c0_15] : memref<1x128xf32, #tpu.memory_space<vmem>>, vector<1x128xf32>
      %17 = vector.broadcast %16 : vector<1x128xf32> to vector<128x128xf32>
      %18 = arith.addf %15, %17 : vector<128x128xf32>
      %cst_16 = arith.constant 0.000000e+00 : f32
      %19 = vector.broadcast %cst_16 : f32 to vector<128x128xf32>
      %20 = arith.maximumf %18, %19 : vector<128x128xf32>
      %21 = arith.truncf %20 : vector<128x128xf32> to vector<128x128xbf16>
      %c0_17 = arith.constant 0 : index
      %c0_18 = arith.constant 0 : index
      %22 = vector.load %arg7[%c0_17, %c0_18] : memref<128x128xbf16, #tpu.memory_space<vmem>>, vector<128x128xbf16>
      tpu.vector_store %arg7[%c0_17, %c0_18], %21 {strides = array<i32>} : memref<128x128xbf16, #tpu.memory_space<vmem>>, vector<128x128xbf16>,
    } else {
    }
    return
  }
  func.func @transform_0(%arg0: i32, %arg1: i32, %arg2: i32) -> (i32, i32) {
    %c0_i32 = arith.constant 0 : i32
    return %arg0, %arg2 : i32, i32
  }
  func.func @transform_1(%arg0: i32, %arg1: i32, %arg2: i32) -> (i32, i32) {
    %c0_i32 = arith.constant 0 : i32
    return %arg2, %arg1 : i32, i32
  }
  func.func @transform_2(%arg0: i32, %arg1: i32, %arg2: i32) -> (i32, i32) {
    %c0_i32 = arith.constant 0 : i32
    %c0_i32_0 = arith.constant 0 : i32
    return %c0_i32, %arg1 : i32, i32
  }
  func.func @transform_3(%arg0: i32, %arg1: i32, %arg2: i32) -> (i32, i32) {
    %c0_i32 = arith.constant 0 : i32
    %c0_i32_0 = arith.constant 0 : i32
    return %c0_i32, %arg1 : i32, i32
  }
  func.func @transform_4(%arg0: i32, %arg1: i32, %arg2: i32) -> (i32, i32) {
    %c0_i32 = arith.constant 0 : i32
    return %arg0, %arg1 : i32, i32
  }
}

</mosaic_0001>

<llo_original>
// kernel: tpu_custom_call.1
$region0: #{tpu_custom_call.1}
  #allocation0 [shape = 'u32[]', space=smem, size = 0x4, offset = 0x4, fixed_abs, tag = 'smem constant byte address 0x4 - core index']
  #allocation1 [shape = 'u32[144,128]{1,0:T(1,128)}', space=vmem, size = 0x12000, scoped, tag = 'internal scratch']
  #allocation2 [shape = 'f32[128,128]{1,0:T(8,128)}', space=vmem, size = 0x10000, scoped, tag = 'scratch operand']
  %s0 = inlined_call_operand.hbm [shape: bf16[128,128], index: 0, kind: input, shape index: {}]
  %s1 = inlined_call_operand.hbm [shape: bf16[128,128], index: 1, kind: input, shape index: {}]
  %s2 = inlined_call_operand.vmem [shape: f32[1,128], index: 2, kind: input, shape index: {}]
  %s3 = inlined_call_operand.vmem [shape: f32[1,128], index: 3, kind: input, shape index: {}]
  %s4 = inlined_call_operand.hbm [shape: bf16[128,128], index: 4, kind: output, shape index: {}]
  %s5 = sld [smem:[#allocation0]]
  $region42: #{tpu_custom_call.1} parent=0
    _
  %s7 = ssub.s32 1, %s5
  %s8 = scalar_select 0, %s7, %s5
  $region1: #{tpu_custom_call.1} parent=0
    #allocation3 [shape = 'u8[32768]{0}', space=vmem, size = 0x8000, scoped, tag = 'input window, operand 0, single buffered']
    #allocation4 [shape = 's32[1]{0}', space=sflag, size = 0x4, scoped, tag = 'scoped memory for tpu_custom_call.1']
    #allocation5 [shape = 's32[1]{0}', space=sflag, size = 0x4, scoped, tag = 'scoped memory for tpu_custom_call.1']
    #allocation6 [shape = 'u8[32768]{0}', space=vmem, size = 0x8000, scoped, tag = 'input window, operand 1, single buffered']
    #allocation7 [shape = 's32[1]{0}', space=sflag, size = 0x4, scoped, tag = 'scoped memory for tpu_custom_call.1']
    #allocation8 [shape = 'u8[32768]{0}', space=vmem, size = 0x8000, scoped, tag = 'output window, operand 0, single buffered']
    %9 = vsyncpa [#allocation4], 0
    %10 = vsyncpa [#allocation7], 0
    %11 = vsyncpa [#allocation5], 0
    // Predicated region
    $region2: #{tpu_custom_call.1} parent=1 // pred_check
      _
    $region3: #{tpu_custom_call.1} parent=1 // pred_check_branch
      %13 = sbr.rel (0) target = $region5
    $region4: #{tpu_custom_call.1} parent=1 // pred_region
      %s15 = ssub.s32 1024, 1024
      %16 = vsyncadd [#allocation4], %s15
      %s17 = sshll.u32 [#allocation3], 4
      %s18 = int_to_ptr.vmem [resolvable:$true] %s17
      %23 = dma.hbm_to_vmem [thread:$0]  %s0, 1024, %s18, [#allocation4], 64, 64, 4
    $region5: #{tpu_custom_call.1} parent=1 // pred_fallthru
      _
    // Predicated region
    $region6: #{tpu_custom_call.1} parent=1 // pred_check
      _
    $region7: #{tpu_custom_call.1} parent=1 // pred_check_branch
      %25 = sbr.rel (0) target = $region9
    $region8: #{tpu_custom_call.1} parent=1 // pred_region
      %s27 = ssub.s32 1024, 1024
      %28 = vsyncadd [#allocation7], %s27
      %s29 = sshll.u32 [#allocation6], 4
      %s30 = int_to_ptr.vmem [resolvable:$true] %s29
      %35 = dma.hbm_to_vmem [thread:$0]  %s1, 1024, %s30, [#allocation7], 64, 64, 4
    $region9: #{tpu_custom_call.1} parent=1 // pred_fallthru
      _
    // Predicated region
    $region10: #{tpu_custom_call.1} parent=1 // pred_check
      _
    $region11: #{tpu_custom_call.1} parent=1 // pred_check_branch
      %37 = sbr.rel (0) target = $region13
    $region12: #{tpu_custom_call.1} parent=1 // pred_region
      _
    $region13: #{tpu_custom_call.1} parent=1 // pred_fallthru
      _
    // Predicated region
    $region14: #{tpu_custom_call.1} parent=1 // pred_check
      _
    $region15: #{tpu_custom_call.1} parent=1 // pred_check_branch
      %39 = sbr.rel (0) target = $region17
    $region16: #{tpu_custom_call.1} parent=1 // pred_region
      _
    $region17: #{tpu_custom_call.1} parent=1 // pred_fallthru
      _
    // Predicated region
    $region18: #{tpu_custom_call.1} parent=1 // pred_check
      _
    $region19: #{tpu_custom_call.1} parent=1 // pred_check_branch
      %41 = sbr.rel (0) target = $region21
    $region20: #{tpu_custom_call.1} parent=1 // pred_region
      %42 = dma.done [#allocation4], 1024
    $region21: #{tpu_custom_call.1} parent=1 // pred_fallthru
      _
    // Predicated region
    $region22: #{tpu_custom_call.1} parent=1 // pred_check
      _
    $region23: #{tpu_custom_call.1} parent=1 // pred_check_branch
      %44 = sbr.rel (0) target = $region25
    $region24: #{tpu_custom_call.1} parent=1 // pred_region
      %45 = dma.done [#allocation7], 1024
    $region25: #{tpu_custom_call.1} parent=1 // pred_fallthru
      _
    %p47 = scmp.eq.s32.totalorder 0, 0
    // Predicated region
    $region26: #{tpu_custom_call.1} parent=1 // pred_check
      %p48 = pneg %p47
    $region27: #{tpu_custom_call.1} parent=1 // pred_check_branch
      %50 = sbr.rel (%p48) target = $region29
    $region28: #{tpu_custom_call.1} parent=1 // pred_region
      %51 = vst [vmem:[#allocation2] sm:$0xff] 0.0
      %52 = vst [vmem:[#allocation2 + $0x8] sm:$0xff] 0.0
      %53 = vst [vmem:[#allocation2 + $0x10] sm:$0xff] 0.0
      %54 = vst [vmem:[#allocation2 + $0x18] sm:$0xff] 0.0
      %55 = vst [vmem:[#allocation2 + $0x20] sm:$0xff] 0.0
      %56 = vst [vmem:[#allocation2 + $0x28] sm:$0xff] 0.0
      %57 = vst [vmem:[#allocation2 + $0x30] sm:$0xff] 0.0
      %58 = vst [vmem:[#allocation2 + $0x38] sm:$0xff] 0.0
      %59 = vst [vmem:[#allocation2 + $0x40] sm:$0xff] 0.0
      %60 = vst [vmem:[#allocation2 + $0x48] sm:$0xff] 0.0
      %61 = vst [vmem:[#allocation2 + $0x50] sm:$0xff] 0.0
      %62 = vst [vmem:[#allocation2 + $0x58] sm:$0xff] 0.0
      %63 = vst [vmem:[#allocation2 + $0x60] sm:$0xff] 0.0
      %64 = vst [vmem:[#allocation2 + $0x68] sm:$0xff] 0.0
      %65 = vst [vmem:[#allocation2 + $0x70] sm:$0xff] 0.0
      %66 = vst [vmem:[#allocation2 + $0x78] sm:$0xff] 0.0
    $region29: #{tpu_custom_call.1} parent=1 // pred_fallthru
      _
    %v67 = vld [vmem:[#allocation2] sm:$0xff]
    %v68 = vld [vmem:[#allocation2 + $0x8] sm:$0xff]
    %v69 = vld [vmem:[#allocation2 + $0x10] sm:$0xff]
    %v70 = vld [vmem:[#allocation2 + $0x18] sm:$0xff]
    %v71 = vld [vmem:[#allocation2 + $0x20] sm:$0xff]
    %v72 = vld [vmem:[#allocation2 + $0x28] sm:$0xff]
    %v73 = vld [vmem:[#allocation2 + $0x30] sm:$0xff]
    %v74 = vld [vmem:[#allocation2 + $0x38] sm:$0xff]
    %v75 = vld [vmem:[#allocation2 + $0x40] sm:$0xff]
    %v76 = vld [vmem:[#allocation2 + $0x48] sm:$0xff]
    %v77 = vld [vmem:[#allocation2 + $0x50] sm:$0xff]
    %v78 = vld [vmem:[#allocation2 + $0x58] sm:$0xff]
    %v79 = vld [vmem:[#allocation2 + $0x60] sm:$0xff]
    %v80 = vld [vmem:[#allocation2 + $0x68] sm:$0xff]
    %v81 = vld [vmem:[#allocation2 + $0x70] sm:$0xff]
    %v82 = vld [vmem:[#allocation2 + $0x78] sm:$0xff]
    %v83 = vld [vmem:[#allocation3] sm:$0xf]
    %v84 = vld [vmem:[#allocation3 + $0x4] sm:$0xf]
    %v85 = vld [vmem:[#allocation3 + $0x8] sm:$0xf]
    %v86 = vld [vmem:[#allocation3 + $0xc] sm:$0xf]
    %v87 = vld [vmem:[#allocation3 + $0x10] sm:$0xf]
    %v88 = vld [vmem:[#allocation3 + $0x14] sm:$0xf]
    %v89 = vld [vmem:[#allocation3 + $0x18] sm:$0xf]
    %v90 = vld [vmem:[#allocation3 + $0x1c] sm:$0xf]
    %v91 = vld [vmem:[#allocation3 + $0x20] sm:$0xf]
    %v92 = vld [vmem:[#allocation3 + $0x24] sm:$0xf]
    %v93 = vld [vmem:[#allocation3 + $0x28] sm:$0xf]
    %v94 = vld [vmem:[#allocation3 + $0x2c] sm:$0xf]
    %v95 = vld [vmem:[#allocation3 + $0x30] sm:$0xf]
    %v96 = vld [vmem:[#allocation3 + $0x34] sm:$0xf]
    %v97 = vld [vmem:[#allocation3 + $0x38] sm:$0xf]
    %v98 = vld [vmem:[#allocation3 + $0x3c] sm:$0xf]
    %v99 = vld [vmem:[#allocation6] sm:$0xf]
    %v100 = vld [vmem:[#allocation6 + $0x4] sm:$0xf]
    %v101 = vld [vmem:[#allocation6 + $0x8] sm:$0xf]
    %v102 = vld [vmem:[#allocation6 + $0xc] sm:$0xf]
    %v103 = vld [vmem:[#allocation6 + $0x10] sm:$0xf]
    %v104 = vld [vmem:[#allocation6 + $0x14] sm:$0xf]
    %v105 = vld [vmem:[#allocation6 + $0x18] sm:$0xf]
    %v106 = vld [vmem:[#allocation6 + $0x1c] sm:$0xf]
    %v107 = vld [vmem:[#allocation6 + $0x20] sm:$0xf]
    %v108 = vld [vmem:[#allocation6 + $0x24] sm:$0xf]
    %v109 = vld [vmem:[#allocation6 + $0x28] sm:$0xf]
    %v110 = vld [vmem:[#allocation6 + $0x2c] sm:$0xf]
    %v111 = vld [vmem:[#allocation6 + $0x30] sm:$0xf]
    %v112 = vld [vmem:[#allocation6 + $0x34] sm:$0xf]
    %v113 = vld [vmem:[#allocation6 + $0x38] sm:$0xf]
    %v114 = vld [vmem:[#allocation6 + $0x3c] sm:$0xf]
    %v131 = vunpack.c.l.b16 %v83
    %v132 = vunpack.c.l.b16 %v84
    %v133 = vunpack.c.l.b16 %v85
    %v134 = vunpack.c.l.b16 %v86
    %v135 = vunpack.c.l.b16 %v87
    %v136 = vunpack.c.l.b16 %v88
    %v137 = vunpack.c.l.b16 %v89
    %v138 = vunpack.c.l.b16 %v90
    %v139 = vunpack.c.l.b16 %v91
    %v140 = vunpack.c.l.b16 %v92
    %v141 = vunpack.c.l.b16 %v93
    %v142 = vunpack.c.l.b16 %v94
    %v143 = vunpack.c.l.b16 %v95
    %v144 = vunpack.c.l.b16 %v96
    %v145 = vunpack.c.l.b16 %v97
    %v146 = vunpack.c.l.b16 %v98
    %v147 = vpack.c.b16 %v132, %v131
    %v148 = vpack.c.b16 %v134, %v133
    %v149 = vpack.c.b16 %v136, %v135
    %v150 = vpack.c.b16 %v138, %v137
    %v151 = vpack.c.b16 %v140, %v139
    %v152 = vpack.c.b16 %v142, %v141
    %v153 = vpack.c.b16 %v144, %v143
    %v154 = vpack.c.b16 %v146, %v145
    %v179 = vunpack.c.l.b16 %v99
    %v180 = vunpack.c.l.b16 %v100
    %v181 = vunpack.c.l.b16 %v101
    %v182 = vunpack.c.l.b16 %v102
    %v183 = vunpack.c.l.b16 %v103
    %v184 = vunpack.c.l.b16 %v104
    %v185 = vunpack.c.l.b16 %v105
    %v186 = vunpack.c.l.b16 %v106
    %v187 = vunpack.c.l.b16 %v107
    %v188 = vunpack.c.l.b16 %v108
    %v189 = vunpack.c.l.b16 %v109
    %v190 = vunpack.c.l.b16 %v110
    %v191 = vunpack.c.l.b16 %v111
    %v192 = vunpack.c.l.b16 %v112
    %v193 = vunpack.c.l.b16 %v113
    %v194 = vunpack.c.l.b16 %v114
    %v195 = vpack.c.b16 %v180, %v179
    %v196 = vpack.c.b16 %v182, %v181
    %v197 = vpack.c.b16 %v184, %v183
    %v198 = vpack.c.b16 %v186, %v185
    %v199 = vpack.c.b16 %v188, %v187
    %v200 = vpack.c.b16 %v190, %v189
    %v201 = vpack.c.b16 %v192, %v191
    %v202 = vpack.c.b16 %v194, %v193
    %211 = vmatprep.subr.bf16.mxu0 0
    %212 = vmatpush1.bf16.msra.mxu0 %v202
    %213 = vmatprep.subr.bf16.mxu0 0
    %214 = vmatpush1.bf16.msra.mxu0 %v201
    %215 = vmatprep.subr.bf16.mxu0 0
    %216 = vmatpush1.bf16.msra.mxu0 %v200
    %217 = vmatprep.subr.bf16.mxu0 0
    %218 = vmatpush1.bf16.msra.mxu0 %v199
    %219 = vmatprep.subr.bf16.mxu0 0
    %220 = vmatpush1.bf16.msra.mxu0 %v198
    %221 = vmatprep.subr.bf16.mxu0 0
    %222 = vmatpush1.bf16.msra.mxu0 %v197
    %223 = vmatprep.subr.bf16.mxu0 0
    %224 = vmatpush1.bf16.msra.mxu0 %v196
    %225 = vmatprep.subr.bf16.mxu0 0
    %226 = vmatpush1.bf16.msra.mxu0 %v195
    %227 = vmatprep.subr.bf16.mxu0 0
    %228 = vmatpush2.bf16.msra.mxu0 0
    %229 = vmatprep.subr.bf16.mxu0 0
    %230 = vmatpush2.bf16.msra.mxu0 0
    %231 = vmatprep.subr.bf16.mxu0 0
    %232 = vmatpush2.bf16.msra.mxu0 0
    %233 = vmatprep.subr.bf16.mxu0 0
    %234 = vmatpush2.bf16.msra.mxu0 0
    %235 = vmatprep.subr.bf16.mxu0 0
    %236 = vmatpush2.bf16.msra.mxu0 0
    %237 = vmatprep.subr.bf16.mxu0 0
    %238 = vmatpush2.bf16.msra.mxu0 0
    %239 = vmatprep.subr.bf16.mxu0 0
    %240 = vmatpush2.bf16.msra.mxu0 0
    %241 = vmatprep.subr.bf16.mxu0 0
    %242 = vmatpush2.bf16.msra.mxu0 0
    %243 = vmatprep.mubr.bf16.mxu0 0
    %244 = vmatmul.mubr.bf16.gmra.mxu0 %v147
    %v245 = vpop.f32.mrf.mxu0
    %v246 = vadd.f32 0.0, %v245
    %v247 = vpop.f32.mrf.mxu0
    %v248 = vpop.f32.mrf.mxu0
    %v249 = vadd.f32 0.0, %v248
    %v250 = vpop.f32.mrf.mxu0
    %251 = vmatprep.mubr.bf16.mxu0 0
    %252 = vmatmul.mubr.bf16.gmra.mxu0 %v148
    %v253 = vpop.f32.mrf.mxu0
    %v254 = vadd.f32 0.0, %v253
    %v255 = vpop.f32.mrf.mxu0
    %v256 = vpop.f32.mrf.mxu0
    %v257 = vadd.f32 0.0, %v256
    %v258 = vpop.f32.mrf.mxu0
    %259 = vmatprep.mubr.bf16.mxu0 0
    %260 = vmatmul.mubr.bf16.gmra.mxu0 %v149
    %v261 = vpop.f32.mrf.mxu0
    %v262 = vadd.f32 0.0, %v261
    %v263 = vpop.f32.mrf.mxu0
    %v264 = vpop.f32.mrf.mxu0
    %v265 = vadd.f32 0.0, %v264
    %v266 = vpop.f32.mrf.mxu0
    %267 = vmatprep.mubr.bf16.mxu0 0
    %268 = vmatmul.mubr.bf16.gmra.mxu0 %v150
    %v269 = vpop.f32.mrf.mxu0
    %v270 = vadd.f32 0.0, %v269
    %v271 = vpop.f32.mrf.mxu0
    %v272 = vpop.f32.mrf.mxu0
    %v273 = vadd.f32 0.0, %v272
    %v274 = vpop.f32.mrf.mxu0
    %275 = vmatprep.mubr.bf16.mxu0 0
    %276 = vmatmul.mubr.bf16.gmra.mxu0 %v151
    %v277 = vpop.f32.mrf.mxu0
    %v278 = vadd.f32 0.0, %v277
    %v279 = vpop.f32.mrf.mxu0
    %v280 = vpop.f32.mrf.mxu0
    %v281 = vadd.f32 0.0, %v280
    %v282 = vpop.f32.mrf.mxu0
    %283 = vmatprep.mubr.bf16.mxu0 0
    %284 = vmatmul.mubr.bf16.gmra.mxu0 %v152
    %v285 = vpop.f32.mrf.mxu0
    %v286 = vadd.f32 0.0, %v285
    %v287 = vpop.f32.mrf.mxu0
    %v288 = vpop.f32.mrf.mxu0
    %v289 = vadd.f32 0.0, %v288
    %v290 = vpop.f32.mrf.mxu0
    %291 = vmatprep.mubr.bf16.mxu0 0
    %292 = vmatmul.mubr.bf16.gmra.mxu0 %v153
    %v293 = vpop.f32.mrf.mxu0
    %v294 = vadd.f32 0.0, %v293
    %v295 = vpop.f32.mrf.mxu0
    %v296 = vpop.f32.mrf.mxu0
    %v297 = vadd.f32 0.0, %v296
    %v298 = vpop.f32.mrf.mxu0
    %299 = vmatprep.mubr.bf16.mxu0 0
    %300 = vmatmul.mubr.bf16.gmra.mxu0 %v154
    %v301 = vpop.f32.mrf.mxu0
    %v302 = vadd.f32 0.0, %v301
    %v303 = vpop.f32.mrf.mxu0
    %v304 = vpop.f32.mrf.mxu0
    %v305 = vadd.f32 0.0, %v304
    %v306 = vpop.f32.mrf.mxu0
    %307 = vdwg.mxu0
    %v308 = vadd.f32 %v67, %v246
    %v309 = vadd.f32 %v68, %v249
    %v310 = vadd.f32 %v69, %v254
    %v311 = vadd.f32 %v70, %v257
    %v312 = vadd.f32 %v71, %v262
    %v313 = vadd.f32 %v72, %v265
    %v314 = vadd.f32 %v73, %v270
    %v315 = vadd.f32 %v74, %v273
    %v316 = vadd.f32 %v75, %v278
    %v317 = vadd.f32 %v76, %v281
    %v318 = vadd.f32 %v77, %v286
    %v319 = vadd.f32 %v78, %v289
    %v320 = vadd.f32 %v79, %v294
    %v321 = vadd.f32 %v80, %v297
    %v322 = vadd.f32 %v81, %v302
    %v323 = vadd.f32 %v82, %v305
    %324 = vst [vmem:[#allocation2] sm:$0xff] %v308
    %325 = vst [vmem:[#allocation2 + $0x8] sm:$0xff] %v309
    %326 = vst [vmem:[#allocation2 + $0x10] sm:$0xff] %v310
    %327 = vst [vmem:[#allocation2 + $0x18] sm:$0xff] %v311
    %328 = vst [vmem:[#allocation2 + $0x20] sm:$0xff] %v312
    %329 = vst [vmem:[#allocation2 + $0x28] sm:$0xff] %v313
    %330 = vst [vmem:[#allocation2 + $0x30] sm:$0xff] %v314
    %331 = vst [vmem:[#allocation2 + $0x38] sm:$0xff] %v315
    %332 = vst [vmem:[#allocation2 + $0x40] sm:$0xff] %v316
    %333 = vst [vmem:[#allocation2 + $0x48] sm:$0xff] %v317
    %334 = vst [vmem:[#allocation2 + $0x50] sm:$0xff] %v318
    %335 = vst [vmem:[#allocation2 + $0x58] sm:$0xff] %v319
    %336 = vst [vmem:[#allocation2 + $0x60] sm:$0xff] %v320
    %337 = vst [vmem:[#allocation2 + $0x68] sm:$0xff] %v321
    %338 = vst [vmem:[#allocation2 + $0x70] sm:$0xff] %v322
    %339 = vst [vmem:[#allocation2 + $0x78] sm:$0xff] %v323
    // Predicated region
    $region30: #{tpu_custom_call.1} parent=1 // pred_check
      %p340 = pneg %p47
    $region31: #{tpu_custom_call.1} parent=1 // pred_check_branch
      %342 = sbr.rel (%p340) target = $region33
    $region32: #{tpu_custom_call.1} parent=1 // pred_region
      %v343 = vld [vmem:[#allocation2] sm:$0xff]
      %v344 = vld [vmem:[#allocation2 + $0x8] sm:$0xff]
      %v345 = vld [vmem:[#allocation2 + $0x10] sm:$0xff]
      %v346 = vld [vmem:[#allocation2 + $0x18] sm:$0xff]
      %v347 = vld [vmem:[#allocation2 + $0x20] sm:$0xff]
      %v348 = vld [vmem:[#allocation2 + $0x28] sm:$0xff]
      %v349 = vld [vmem:[#allocation2 + $0x30] sm:$0xff]
      %v350 = vld [vmem:[#allocation2 + $0x38] sm:$0xff]
      %v351 = vld [vmem:[#allocation2 + $0x40] sm:$0xff]
      %v352 = vld [vmem:[#allocation2 + $0x48] sm:$0xff]
      %v353 = vld [vmem:[#allocation2 + $0x50] sm:$0xff]
      %v354 = vld [vmem:[#allocation2 + $0x58] sm:$0xff]
      %v355 = vld [vmem:[#allocation2 + $0x60] sm:$0xff]
      %v356 = vld [vmem:[#allocation2 + $0x68] sm:$0xff]
      %v357 = vld [vmem:[#allocation2 + $0x70] sm:$0xff]
      %v358 = vld [vmem:[#allocation2 + $0x78] sm:$0xff]
      %v359 = vld [vmem:[%s2] sm:$0x1]
      %v361 = vlaneseq
      %v362 = vshrl.u32 %v361, 7
      %v363 = vsub.s32 0, %v362
      %v364 = vrot.slane %v359, %v363
      %v366 = vmul.f32 %v343, %v364
      %v367 = vmul.f32 %v344, %v364
      %v368 = vmul.f32 %v345, %v364
      %v369 = vmul.f32 %v346, %v364
      %v370 = vmul.f32 %v347, %v364
      %v371 = vmul.f32 %v348, %v364
      %v372 = vmul.f32 %v349, %v364
      %v373 = vmul.f32 %v350, %v364
      %v374 = vmul.f32 %v351, %v364
      %v375 = vmul.f32 %v352, %v364
      %v376 = vmul.f32 %v353, %v364
      %v377 = vmul.f32 %v354, %v364
      %v378 = vmul.f32 %v355, %v364
      %v379 = vmul.f32 %v356, %v364
      %v380 = vmul.f32 %v357, %v364
      %v381 = vmul.f32 %v358, %v364
      %v382 = vld [vmem:[%s3] sm:$0x1]
      %v384 = vlaneseq
      %v385 = vshrl.u32 %v384, 7
      %v386 = vsub.s32 0, %v385
      %v387 = vrot.slane %v382, %v386
      %v389 = vadd.f32 %v366, %v387
      %v390 = vadd.f32 %v367, %v387
      %v391 = vadd.f32 %v368, %v387
      %v392 = vadd.f32 %v369, %v387
      %v393 = vadd.f32 %v370, %v387
      %v394 = vadd.f32 %v371, %v387
      %v395 = vadd.f32 %v372, %v387
      %v396 = vadd.f32 %v373, %v387
      %v397 = vadd.f32 %v374, %v387
      %v398 = vadd.f32 %v375, %v387
      %v399 = vadd.f32 %v376, %v387
      %v400 = vadd.f32 %v377, %v387
      %v401 = vadd.f32 %v378, %v387
      %v402 = vadd.f32 %v379, %v387
      %v403 = vadd.f32 %v380, %v387
      %v404 = vadd.f32 %v381, %v387
      %v405 = vmax.f32 %v389, 0.0
      %v406 = vmax.f32 %v390, 0.0
      %v407 = vmax.f32 %v391, 0.0
      %v408 = vmax.f32 %v392, 0.0
      %v409 = vmax.f32 %v393, 0.0
      %v410 = vmax.f32 %v394, 0.0
      %v411 = vmax.f32 %v395, 0.0
      %v412 = vmax.f32 %v396, 0.0
      %v413 = vmax.f32 %v397, 0.0
      %v414 = vmax.f32 %v398, 0.0
      %v415 = vmax.f32 %v399, 0.0
      %v416 = vmax.f32 %v400, 0.0
      %v417 = vmax.f32 %v401, 0.0
      %v418 = vmax.f32 %v402, 0.0
      %v419 = vmax.f32 %v403, 0.0
      %v420 = vmax.f32 %v404, 0.0
      %v421 = vpack.c.bf16 %v406, %v405
      %v422 = vpack.c.bf16 %v408, %v407
      %v423 = vpack.c.bf16 %v410, %v409
      %v424 = vpack.c.bf16 %v412, %v411
      %v425 = vpack.c.bf16 %v414, %v413
      %v426 = vpack.c.bf16 %v416, %v415
      %v427 = vpack.c.bf16 %v418, %v417
      %v428 = vpack.c.bf16 %v420, %v419
      %v437 = vunpack.c.l.b16 %v421
      %v438 = vunpack.c.h.b16 %v421
      %v439 = vunpack.c.l.b16 %v422
      %v440 = vunpack.c.h.b16 %v422
      %v441 = vunpack.c.l.b16 %v423
      %v442 = vunpack.c.h.b16 %v423
      %v443 = vunpack.c.l.b16 %v424
      %v444 = vunpack.c.h.b16 %v424
      %v445 = vunpack.c.l.b16 %v425
      %v446 = vunpack.c.h.b16 %v425
      %v447 = vunpack.c.l.b16 %v426
      %v448 = vunpack.c.h.b16 %v426
      %v449 = vunpack.c.l.b16 %v427
      %v450 = vunpack.c.h.b16 %v427
      %v451 = vunpack.c.l.b16 %v428
      %v452 = vunpack.c.h.b16 %v428
      %v453 = vpack.c.b16 %v437, %v437
      %v454 = vpack.c.b16 %v438, %v438
      %v455 = vpack.c.b16 %v439, %v439
      %v456 = vpack.c.b16 %v440, %v440
      %v457 = vpack.c.b16 %v441, %v441
      %v458 = vpack.c.b16 %v442, %v442
      %v459 = vpack.c.b16 %v443, %v443
      %v460 = vpack.c.b16 %v444, %v444
      %v461 = vpack.c.b16 %v445, %v445
      %v462 = vpack.c.b16 %v446, %v446
      %v463 = vpack.c.b16 %v447, %v447
      %v464 = vpack.c.b16 %v448, %v448
      %v465 = vpack.c.b16 %v449, %v449
      %v466 = vpack.c.b16 %v450, %v450
      %v467 = vpack.c.b16 %v451, %v451
      %v468 = vpack.c.b16 %v452, %v452
      %485 = vst [vmem:[#allocation8] sm:$0xf] %v453
      %486 = vst [vmem:[#allocation8 + $0x4] sm:$0xf] %v454
      %487 = vst [vmem:[#allocation8 + $0x8] sm:$0xf] %v455
      %488 = vst [vmem:[#allocation8 + $0xc] sm:$0xf] %v456
      %489 = vst [vmem:[#allocation8 + $0x10] sm:$0xf] %v457
      %490 = vst [vmem:[#allocation8 + $0x14] sm:$0xf] %v458
      %491 = vst [vmem:[#allocation8 + $0x18] sm:$0xf] %v459
      %492 = vst [vmem:[#allocation8 + $0x1c] sm:$0xf] %v460
      %493 = vst [vmem:[#allocation8 + $0x20] sm:$0xf] %v461
      %494 = vst [vmem:[#allocation8 + $0x24] sm:$0xf] %v462
      %495 = vst [vmem:[#allocation8 + $0x28] sm:$0xf] %v463
      %496 = vst [vmem:[#allocation8 + $0x2c] sm:$0xf] %v464
      %497 = vst [vmem:[#allocation8 + $0x30] sm:$0xf] %v465
      %498 = vst [vmem:[#allocation8 + $0x34] sm:$0xf] %v466
      %499 = vst [vmem:[#allocation8 + $0x38] sm:$0xf] %v467
      %500 = vst [vmem:[#allocation8 + $0x3c] sm:$0xf] %v468
    $region33: #{tpu_custom_call.1} parent=1 // pred_fallthru
      _
    // Predicated region
    $region34: #{tpu_custom_call.1} parent=1 // pred_check
      _
    $region35: #{tpu_custom_call.1} parent=1 // pred_check_branch
      %502 = sbr.rel (0) target = $region37
    $region36: #{tpu_custom_call.1} parent=1 // pred_region
      %s504 = ssub.s32 1024, 1024
      %505 = vsyncadd [#allocation5], %s504
      %s506 = sshll.u32 [#allocation8], 4
      %s507 = int_to_ptr.vmem [resolvable:$true] %s506
      %512 = dma.vmem_to_hbm [thread:$0]  %s507, 1024, %s4, [#allocation5], 64, 64, 4
    $region37: #{tpu_custom_call.1} parent=1 // pred_fallthru
      _
    // Predicated region
    $region38: #{tpu_custom_call.1} parent=1 // pred_check
      _
    $region39: #{tpu_custom_call.1} parent=1 // pred_check_branch
      %514 = sbr.rel (0) target = $region41
    $region40: #{tpu_custom_call.1} parent=1 // pred_region
      %515 = dma.done [#allocation5], 1024
    $region41: #{tpu_custom_call.1} parent=1 // pred_fallthru
      _
    %516 = vsyncpa [#allocation4], 1
    %517 = vsyncpa [#allocation7], 1
    %518 = vsyncpa [#allocation5], 1

</llo_original>
